<compile_context>
chip_gen: v6e
topology: v6e:2x2x1
jax: 0.10.0
libtpu: 0.0.40
codegen_flags: <defaults>
</compile_context>

<pallas_src>
import functools

import jax
import jax.numpy as jnp
from jax.experimental import pallas as pl
from jax.experimental.pallas import tpu as pltpu

LANE = 128      # TPU lane width (last dim)
SUBLANE = 8     # TPU sublane width (second-to-last dim, f32)


def _round_up(n, m):
    return ((n + m - 1) // m) * m


def _mlp_kernel(x_ref, w1t_ref, b1_ref, w2sq_ref, b2eff_ref, o_ref):
    # fc1 + relu1 on a (tm, K) tile of x; weights are VMEM-resident.
    h = jnp.dot(x_ref[...], w1t_ref[...], preferred_element_type=jnp.float32)
    h = jnp.maximum(h + b1_ref[...], 0.0)
    # Doubled fc2 folded into one matmul (W2sq / b2eff precomputed once).
    o = jnp.dot(h, w2sq_ref[...], preferred_element_type=jnp.float32) + b2eff_ref[...]
    o_ref[...] = o.astype(o_ref.dtype)


def prepare_params(params):
    """One-time preprocessing (do NOT call per forward):
    transpose weights to (in, out), zero-pad lane dims to multiples of 128,
    and fold the doubled fc2 into a single (W2sq, b2eff) pair."""
    w1t = params["fc1_w"].T.astype(jnp.float32)   # (K, H)
    b1 = params["fc1_b"].astype(jnp.float32)      # (H,)
    w2t = params["fc2_w"].T.astype(jnp.float32)   # (H, H)
    b2 = params["fc2_b"].astype(jnp.float32)      # (H,)

    K, H = w1t.shape
    Hp = _round_up(H, LANE)

    w1t_p = jnp.zeros((K, Hp), jnp.float32).at[:, :H].set(w1t)
    b1_p = jnp.zeros((1, Hp), jnp.float32).at[0, :H].set(b1)
    w2t_p = jnp.zeros((Hp, Hp), jnp.float32).at[:H, :H].set(w2t)
    b2_p = jnp.zeros((1, Hp), jnp.float32).at[0, :H].set(b2)

    # Zero padding keeps the folded matmul exact for the logical lanes and
    # produces exact zeros in the padded lanes (sliced off in the wrapper).
    w2sq = jnp.dot(w2t_p, w2t_p, preferred_element_type=jnp.float32)
    b2eff = jnp.dot(b2_p, w2t_p, preferred_element_type=jnp.float32) + b2_p

    return {"w1t": w1t_p, "b1": b1_p, "w2sq": w2sq, "b2eff": b2eff}


def _pick_batch_tile(B):
    """One grid step for small batches; 256-row tiles beyond that."""
    tm_single = _round_up(B, SUBLANE)
    if tm_single <= 512:
        return tm_single
    return 256


@functools.partial(jax.jit, static_argnames=("out_features",))
def mlp_forward(x, prepared, out_features):
    """x: (B, input_size) float32. prepared: output of prepare_params()."""
    w1t = prepared["w1t"]      # (K, Hp)
    b1 = prepared["b1"]        # (1, Hp)
    w2sq = prepared["w2sq"]    # (Hp, Hp)
    b2eff = prepared["b2eff"]  # (1, Hp)

    B, K = x.shape
    Hp = w1t.shape[1]

    # Batch tiling: rows per grid step (weights stay resident across steps).
    tm = _pick_batch_tile(B)
    Bp = _round_up(B, tm)
    if Bp != B:
        x = jnp.pad(x, ((0, Bp - B), (0, 0)))
    grid = (Bp // tm,)

    cost = pl.CostEstimate(
        flops=2 * Bp * K * Hp + 2 * Bp * Hp * Hp,
        transcendentals=0,
        bytes_accessed=4 * (Bp * K + K * Hp + Hp + Hp * Hp + Hp + Bp * Hp),
    )

    # Only raise the scoped-VMEM limit when the resident weights plus
    # double-buffered activation tiles would not fit the conservative default.
    resident_bytes = 4 * (K * Hp + Hp * Hp + 2 * Hp)
    tile_bytes = 4 * (tm * K + tm * Hp)
    vmem_need = 2 * resident_bytes + 2 * tile_bytes          # worst-case 2x buffering
    compiler_kwargs = dict(dimension_semantics=("parallel",))
    if vmem_need > (16 << 20):
        compiler_kwargs["vmem_limit_bytes"] = min(
            vmem_need + (8 << 20), 60 << 20)                  # stay under v7x physical

    out_p = pl.pallas_call(
        _mlp_kernel,
        out_shape=jax.ShapeDtypeStruct((Bp, Hp), jnp.float32),
        grid=grid,
        in_specs=[
            pl.BlockSpec((tm, K), lambda i: (i, 0)),    # x tile
            pl.BlockSpec((K, Hp), lambda i: (0, 0)),    # w1t (resident)
            pl.BlockSpec((1, Hp), lambda i: (0, 0)),    # b1
            pl.BlockSpec((Hp, Hp), lambda i: (0, 0)),   # w2sq (resident)
            pl.BlockSpec((1, Hp), lambda i: (0, 0)),    # b2eff
        ],
        out_specs=pl.BlockSpec((tm, Hp), lambda i: (i, 0)),
        compiler_params=pltpu.CompilerParams(**compiler_kwargs),
        cost_estimate=cost,
    )(x, w1t, b1, w2sq, b2eff)

    # Slice back to the logical (B, hidden_size) output (fused under jit).
    return out_p[:B, :out_features]


def init_params(key, input_size, hidden_size, num_classes):
    # Deterministic, PyTorch-Linear-style uniform init (U(-1/sqrt(fan_in), ...)).
    ks = jax.random.split(key, 6)

    def lin(kw, kb, fan_in, fan_out):
        bound = 1.0 / jnp.sqrt(fan_in)
        w = jax.random.uniform(kw, (fan_out, fan_in), jnp.float32, -bound, bound)
        b = jax.random.uniform(kb, (fan_out,), jnp.float32, -bound, bound)
        return w, b

    fc1_w, fc1_b = lin(ks[0], ks[1], input_size, hidden_size)
    fc2_w, fc2_b = lin(ks[2], ks[3], hidden_size, hidden_size)
    fc3_w, fc3_b = lin(ks[4], ks[5], hidden_size, num_classes)  # unused in forward
    return {
        "fc1_w": fc1_w, "fc1_b": fc1_b,
        "fc2_w": fc2_w, "fc2_b": fc2_b,
        "fc3_w": fc3_w, "fc3_b": fc3_b,
    }


def mlp_ref(x, params):
    h = x @ params["fc1_w"].T + params["fc1_b"]
    h = jnp.maximum(h, 0.0)
    h = h @ params["fc2_w"].T + params["fc2_b"]
    h = h @ params["fc2_w"].T + params["fc2_b"]
    return h


if __name__ == "__main__":
    input_size, hidden_size, num_classes = 16, 32, 10
    batch = 8

    key = jax.random.PRNGKey(0)
    kx, kp = jax.random.split(key)
    x = jax.random.normal(kx, (batch, input_size), jnp.float32)
    params = init_params(kp, input_size, hidden_size, num_classes)

    # One-time weight prep (transpose + pad + fold doubled fc2).
    prepared = prepare_params(params)
    prepared = jax.tree.map(jax.block_until_ready, prepared)

    out = mlp_forward(x, prepared, out_features=hidden_size)
    out = jax.block_until_ready(out)

    ref = mlp_ref(x, params)
    assert out.shape == (batch, hidden_size)
    assert jnp.allclose(out, ref, atol=1e-5, rtol=1e-5)
    print("KERNEL_OK")
</pallas_src>

<mosaic_0001>
module attributes {stable_mosaic.version = 11 : i64} {
  func.func @_mlp_kernel(%arg0: i32, %arg1: memref<8x16xf32, #tpu.memory_space<vmem>>, %arg2: memref<16x128xf32, #tpu.memory_space<vmem>>, %arg3: memref<1x128xf32, #tpu.memory_space<vmem>>, %arg4: memref<128x128xf32, #tpu.memory_space<vmem>>, %arg5: memref<1x128xf32, #tpu.memory_space<vmem>>, %arg6: memref<8x128xf32, #tpu.memory_space<vmem>>) attributes {dimension_semantics = [#tpu.dimension_semantics<parallel>], iteration_bounds = array<i64: 1>, scalar_prefetch = 0 : i64, scratch_operands = 0 : i64, tpu.core_type = #tpu.core_type<tc>, window_params = [{transform_indices = @transform_0, window_bounds = array<i64: 8, 16>}, {pipeline_mode = #tpu.pipeline_mode<synchronous>, transform_indices = @transform_1, window_bounds = array<i64: 16, 128>}, {pipeline_mode = #tpu.pipeline_mode<synchronous>, transform_indices = @transform_2, window_bounds = array<i64: 1, 128>}, {pipeline_mode = #tpu.pipeline_mode<synchronous>, transform_indices = @transform_3, window_bounds = array<i64: 128, 128>}, {pipeline_mode = #tpu.pipeline_mode<synchronous>, transform_indices = @transform_4, window_bounds = array<i64: 1, 128>}, {transform_indices = @transform_5, window_bounds = array<i64: 8, 128>}]} {
    %c0 = arith.constant 0 : index
    %c0_0 = arith.constant 0 : index
    %0 = vector.load %arg1[%c0, %c0_0] : memref<8x16xf32, #tpu.memory_space<vmem>>, vector<8x16xf32>
    %c0_1 = arith.constant 0 : index
    %c0_2 = arith.constant 0 : index
    %1 = vector.load %arg2[%c0_1, %c0_2] : memref<16x128xf32, #tpu.memory_space<vmem>>, vector<16x128xf32>
    %cst = arith.constant dense<0.000000e+00> : vector<8x128xf32>
    %2 = tpu.matmul %0, %1, %cst {dimension_numbers = #tpu.dot_dimension_numbers<[1], [0], [0], [1], [0, 0, 1, 1], [], []>} : vector<8x16xf32>, vector<16x128xf32>, vector<8x128xf32> -> vector<8x128xf32>
    %c0_3 = arith.constant 0 : index
    %c0_4 = arith.constant 0 : index
    %3 = vector.load %arg3[%c0_3, %c0_4] : memref<1x128xf32, #tpu.memory_space<vmem>>, vector<1x128xf32>
    %4 = vector.broadcast %3 : vector<1x128xf32> to vector<8x128xf32>
    %5 = arith.addf %2, %4 : vector<8x128xf32>
    %cst_5 = arith.constant 0.000000e+00 : f32
    %6 = vector.broadcast %cst_5 : f32 to vector<8x128xf32>
    %7 = arith.maximumf %5, %6 : vector<8x128xf32>
    %c0_6 = arith.constant 0 : index
    %c0_7 = arith.constant 0 : index
    %8 = vector.load %arg4[%c0_6, %c0_7] : memref<128x128xf32, #tpu.memory_space<vmem>>, vector<128x128xf32>
    %cst_8 = arith.constant dense<0.000000e+00> : vector<8x128xf32>
    %9 = tpu.matmul %7, %8, %cst_8 {dimension_numbers = #tpu.dot_dimension_numbers<[1], [0], [0], [1], [0, 0, 1, 1], [], []>} : vector<8x128xf32>, vector<128x128xf32>, vector<8x128xf32> -> vector<8x128xf32>
    %c0_9 = arith.constant 0 : index
    %c0_10 = arith.constant 0 : index
    %10 = vector.load %arg5[%c0_9, %c0_10] : memref<1x128xf32, #tpu.memory_space<vmem>>, vector<1x128xf32>
    %11 = vector.broadcast %10 : vector<1x128xf32> to vector<8x128xf32>
    %12 = arith.addf %9, %11 : vector<8x128xf32>
    %c0_11 = arith.constant 0 : index
    %c0_12 = arith.constant 0 : index
    %13 = vector.load %arg6[%c0_11, %c0_12] : memref<8x128xf32, #tpu.memory_space<vmem>>, vector<8x128xf32>
    tpu.vector_store %arg6[%c0_11, %c0_12], %12 {strides = array<i32>} : memref<8x128xf32, #tpu.memory_space<vmem>>, vector<8x128xf32>,
    return
  }
  func.func @transform_0(%arg0: i32) -> (i32, i32) {
    %c0_i32 = arith.constant 0 : i32
    %c0_i32_0 = arith.constant 0 : i32
    return %arg0, %c0_i32 : i32, i32
  }
  func.func @transform_1(%arg0: i32) -> (i32, i32) {
    %c0_i32 = arith.constant 0 : i32
    %c0_i32_0 = arith.constant 0 : i32
    %c0_i32_1 = arith.constant 0 : i32
    return %c0_i32, %c0_i32_0 : i32, i32
  }
  func.func @transform_2(%arg0: i32) -> (i32, i32) {
    %c0_i32 = arith.constant 0 : i32
    %c0_i32_0 = arith.constant 0 : i32
    %c0_i32_1 = arith.constant 0 : i32
    return %c0_i32, %c0_i32_0 : i32, i32
  }
  func.func @transform_3(%arg0: i32) -> (i32, i32) {
    %c0_i32 = arith.constant 0 : i32
    %c0_i32_0 = arith.constant 0 : i32
    %c0_i32_1 = arith.constant 0 : i32
    return %c0_i32, %c0_i32_0 : i32, i32
  }
  func.func @transform_4(%arg0: i32) -> (i32, i32) {
    %c0_i32 = arith.constant 0 : i32
    %c0_i32_0 = arith.constant 0 : i32
    %c0_i32_1 = arith.constant 0 : i32
    return %c0_i32, %c0_i32_0 : i32, i32
  }
  func.func @transform_5(%arg0: i32) -> (i32, i32) {
    %c0_i32 = arith.constant 0 : i32
    %c0_i32_0 = arith.constant 0 : i32
    return %arg0, %c0_i32 : i32, i32
  }
}

</mosaic_0001>

<llo_original>
// kernel: mlp_forward.1
$region0: #{mlp_forward.1}
  #allocation0 [shape = 'u32[]', space=smem, size = 0x4, offset = 0x4, fixed_abs, tag = 'smem constant byte address 0x4 - core index']
  #allocation1 [shape = 'u32[144,128]{1,0:T(1,128)}', space=vmem, size = 0x12000, scoped, tag = 'internal scratch']
  %s0 = inlined_call_operand.hbm [shape: f32[8,16], index: 0, kind: input, shape index: {}]
  %s1 = inlined_call_operand.hbm [shape: f32[16,128], index: 1, kind: input, shape index: {}]
  %s2 = inlined_call_operand.vmem [shape: f32[1,128], index: 2, kind: input, shape index: {}]
  %s3 = inlined_call_operand.hbm [shape: f32[128,128], index: 3, kind: input, shape index: {}]
  %s4 = inlined_call_operand.vmem [shape: f32[1,128], index: 4, kind: input, shape index: {}]
  %s5 = inlined_call_operand.hbm [shape: f32[8,128], index: 5, kind: output, shape index: {}]
  %s6 = sld [smem:[#allocation0]]
  $region42: #{mlp_forward.1} parent=0
    _
  %s8 = ssub.s32 1, %s6
  %s9 = scalar_select 0, %s8, %s6
  $region1: #{mlp_forward.1} parent=0
    #allocation2 [shape = 'u8[4096]{0}', space=vmem, size = 0x1000, scoped, tag = 'input window, operand 0, single buffered']
    #allocation3 [shape = 's32[1]{0}', space=sflag, size = 0x4, scoped, tag = 'scoped memory for mlp_forward.1']
    #allocation4 [shape = 's32[1]{0}', space=sflag, size = 0x4, scoped, tag = 'scoped memory for mlp_forward.1']
    #allocation5 [shape = 'u8[8192]{0}', space=vmem, size = 0x2000, scoped, tag = 'input window, operand 1, single buffered']
    #allocation6 [shape = 's32[1]{0}', space=sflag, size = 0x4, scoped, tag = 'scoped memory for mlp_forward.1']
    #allocation7 [shape = 'u8[65536]{0}', space=vmem, size = 0x10000, scoped, tag = 'input window, operand 3, single buffered']
    #allocation8 [shape = 'u8[4096]{0}', space=vmem, size = 0x1000, scoped, tag = 'output window, operand 0, single buffered']
    %10 = vsyncpa [#allocation3], 0
    %11 = vsyncpa [#allocation6], 0
    %12 = vsyncpa [#allocation4], 0
    // Predicated region
    $region2: #{mlp_forward.1} parent=1 // pred_check
      _
    $region3: #{mlp_forward.1} parent=1 // pred_check_branch
      %14 = sbr.rel (0) target = $region5
    $region4: #{mlp_forward.1} parent=1 // pred_region
      %s16 = ssub.s32 128, 128
      %17 = vsyncadd [#allocation3], %s16
      %s19 = sshll.u32 [#allocation2], 4
      %s20 = int_to_ptr.vmem [resolvable:$true] %s19
      %22 = dma.hbm_to_vmem [thread:$0]  %s0, 128, %s20, [#allocation3]
    $region5: #{mlp_forward.1} parent=1 // pred_fallthru
      _
    // Predicated region
    $region6: #{mlp_forward.1} parent=1 // pred_check
      _
    $region7: #{mlp_forward.1} parent=1 // pred_check_branch
      %24 = sbr.rel (0) target = $region9
    $region8: #{mlp_forward.1} parent=1 // pred_region
      %s26 = ssub.s32 256, 256
      %27 = vsyncadd [#allocation6], %s26
      %s28 = sshll.u32 [#allocation5], 4
      %s29 = int_to_ptr.vmem [resolvable:$true] %s28
      %34 = dma.hbm_to_vmem [thread:$0]  %s1, 256, %s29, [#allocation6], 128, 128, 8
    $region9: #{mlp_forward.1} parent=1 // pred_fallthru
      _
    // Predicated region
    $region10: #{mlp_forward.1} parent=1 // pred_check
      _
    $region11: #{mlp_forward.1} parent=1 // pred_check_branch
      %36 = sbr.rel (0) target = $region13
    $region12: #{mlp_forward.1} parent=1 // pred_region
      _
    $region13: #{mlp_forward.1} parent=1 // pred_fallthru
      _
    // Predicated region
    $region14: #{mlp_forward.1} parent=1 // pred_check
      _
    $region15: #{mlp_forward.1} parent=1 // pred_check_branch
      %38 = sbr.rel (0) target = $region17
    $region16: #{mlp_forward.1} parent=1 // pred_region
      %s40 = ssub.s32 2048, 2048
      %41 = vsyncadd [#allocation6], %s40
      %s42 = sshll.u32 [#allocation7], 4
      %s43 = int_to_ptr.vmem [resolvable:$true] %s42
      %48 = dma.hbm_to_vmem [thread:$0]  %s3, 2048, %s43, [#allocation6], 128, 128, 8
    $region17: #{mlp_forward.1} parent=1 // pred_fallthru
      _
    // Predicated region
    $region18: #{mlp_forward.1} parent=1 // pred_check
      _
    $region19: #{mlp_forward.1} parent=1 // pred_check_branch
      %50 = sbr.rel (0) target = $region21
    $region20: #{mlp_forward.1} parent=1 // pred_region
      _
    $region21: #{mlp_forward.1} parent=1 // pred_fallthru
      _
    // Predicated region
    $region22: #{mlp_forward.1} parent=1 // pred_check
      _
    $region23: #{mlp_forward.1} parent=1 // pred_check_branch
      %52 = sbr.rel (0) target = $region25
    $region24: #{mlp_forward.1} parent=1 // pred_region
      %53 = dma.done [#allocation3], 128
    $region25: #{mlp_forward.1} parent=1 // pred_fallthru
      _
    // Predicated region
    $region26: #{mlp_forward.1} parent=1 // pred_check
      _
    $region27: #{mlp_forward.1} parent=1 // pred_check_branch
      %55 = sbr.rel (0) target = $region29
    $region28: #{mlp_forward.1} parent=1 // pred_region
      %56 = dma.done [#allocation6], 256
    $region29: #{mlp_forward.1} parent=1 // pred_fallthru
      _
    // Predicated region
    $region30: #{mlp_forward.1} parent=1 // pred_check
      _
    $region31: #{mlp_forward.1} parent=1 // pred_check_branch
      %58 = sbr.rel (0) target = $region33
    $region32: #{mlp_forward.1} parent=1 // pred_region
      %59 = dma.done [#allocation6], 2048
    $region33: #{mlp_forward.1} parent=1 // pred_fallthru
      _
    %v60 = vld [vmem:[#allocation2] sm:$0xff]
    %v61 = vld [vmem:[#allocation5] sm:$0xff]
    %v62 = vld [vmem:[#allocation5 + $0x8] sm:$0xff]
    %v63 = vld [vmem:[%s2] sm:$0x1]
    %v65 = vlaneseq
    %v66 = vshrl.u32 %v65, 7
    %v67 = vsub.s32 0, %v66
    %v68 = vrot.slane %v63, %v67
    %vm70 = vcmask 130048
    %v72 = vsel %vm70, %v60, 0
    %74 = vmatprep.subr.mxu0 0.0
    %75 = vmatpush1.msra.mxu0 0.0
    %76 = vmatprep.subr.mxu0 0.0
    %77 = vmatpush1.msra.mxu0 0.0
    %78 = vmatprep.subr.mxu0 0.0
    %79 = vmatpush1.msra.mxu0 0.0
    %80 = vmatprep.subr.mxu0 0.0
    %81 = vmatpush1.msra.mxu0 0.0
    %82 = vmatprep.subr.mxu0 0.0
    %83 = vmatpush1.msra.mxu0 0.0
    %84 = vmatprep.subr.mxu0 0.0
    %85 = vmatpush1.msra.mxu0 0.0
    %86 = vmatprep.subr.mxu0 0.0
    %87 = vmatpush1.msra.mxu0 0.0
    %88 = vmatprep.subr.mxu0 0.0
    %89 = vmatpush1.msra.mxu0 0.0
    %90 = vmatprep.subr.mxu0 0.0
    %91 = vmatpush1.msra.mxu0 0.0
    %92 = vmatprep.subr.mxu0 0.0
    %93 = vmatpush1.msra.mxu0 0.0
    %94 = vmatprep.subr.mxu0 0.0
    %95 = vmatpush1.msra.mxu0 0.0
    %96 = vmatprep.subr.mxu0 0.0
    %97 = vmatpush1.msra.mxu0 0.0
    %98 = vmatprep.subr.mxu0 0.0
    %99 = vmatpush1.msra.mxu0 0.0
    %100 = vmatprep.subr.mxu0 0.0
    %101 = vmatpush1.msra.mxu0 0.0
    %102 = vmatprep.subr.mxu0 0.0
    %103 = vmatpush1.msra.mxu0 %v62
    %104 = vmatprep.subr.mxu0 0.0
    %105 = vmatpush1.msra.mxu0 %v61
    %106 = vmatprep.subr.mxu0 0.0
    %107 = vmatpush2.msra.mxu0 0.0
    %108 = vmatprep.subr.mxu0 0.0
    %109 = vmatpush2.msra.mxu0 0.0
    %110 = vmatprep.subr.mxu0 0.0
    %111 = vmatpush2.msra.mxu0 0.0
    %112 = vmatprep.subr.mxu0 0.0
    %113 = vmatpush2.msra.mxu0 0.0
    %114 = vmatprep.subr.mxu0 0.0
    %115 = vmatpush2.msra.mxu0 0.0
    %116 = vmatprep.subr.mxu0 0.0
    %117 = vmatpush2.msra.mxu0 0.0
    %118 = vmatprep.subr.mxu0 0.0
    %119 = vmatpush2.msra.mxu0 0.0
    %120 = vmatprep.subr.mxu0 0.0
    %121 = vmatpush2.msra.mxu0 0.0
    %122 = vmatprep.subr.mxu0 0.0
    %123 = vmatpush2.msra.mxu0 0.0
    %124 = vmatprep.subr.mxu0 0.0
    %125 = vmatpush2.msra.mxu0 0.0
    %126 = vmatprep.subr.mxu0 0.0
    %127 = vmatpush2.msra.mxu0 0.0
    %128 = vmatprep.subr.mxu0 0.0
    %129 = vmatpush2.msra.mxu0 0.0
    %130 = vmatprep.subr.mxu0 0.0
    %131 = vmatpush2.msra.mxu0 0.0
    %132 = vmatprep.subr.mxu0 0.0
    %133 = vmatpush2.msra.mxu0 0.0
    %134 = vmatprep.subr.mxu0 0.0
    %135 = vmatpush2.msra.mxu0 0.0
    %136 = vmatprep.subr.mxu0 0.0
    %137 = vmatpush2.msra.mxu0 0.0
    %138 = vmatprep.mubr.f32.mxu0 0.0
    %139 = vmatmul.mubr.f32.gmra.mxu0 %v72
    %v140 = vpop.f32.mrf.mxu0
    %v141 = vadd.f32 %v68, %v140
    %v142 = vpop.f32.mrf.mxu0
    %143 = vdwg.mxu0
    %v144 = vmax.f32 %v141, 0.0
    %v145 = vld [vmem:[#allocation7] sm:$0xff]
    %v146 = vld [vmem:[#allocation7 + $0x8] sm:$0xff]
    %v147 = vld [vmem:[#allocation7 + $0x10] sm:$0xff]
    %v148 = vld [vmem:[#allocation7 + $0x18] sm:$0xff]
    %v149 = vld [vmem:[#allocation7 + $0x20] sm:$0xff]
    %v150 = vld [vmem:[#allocation7 + $0x28] sm:$0xff]
    %v151 = vld [vmem:[#allocation7 + $0x30] sm:$0xff]
    %v152 = vld [vmem:[#allocation7 + $0x38] sm:$0xff]
    %v153 = vld [vmem:[#allocation7 + $0x40] sm:$0xff]
    %v154 = vld [vmem:[#allocation7 + $0x48] sm:$0xff]
    %v155 = vld [vmem:[#allocation7 + $0x50] sm:$0xff]
    %v156 = vld [vmem:[#allocation7 + $0x58] sm:$0xff]
    %v157 = vld [vmem:[#allocation7 + $0x60] sm:$0xff]
    %v158 = vld [vmem:[#allocation7 + $0x68] sm:$0xff]
    %v159 = vld [vmem:[#allocation7 + $0x70] sm:$0xff]
    %v160 = vld [vmem:[#allocation7 + $0x78] sm:$0xff]
    %v161 = vld [vmem:[%s4] sm:$0x1]
    %v163 = vlaneseq
    %v164 = vshrl.u32 %v163, 7
    %v165 = vsub.s32 0, %v164
    %v166 = vrot.slane %v161, %v165
    %168 = vmatprep.subr.mxu0 0.0
    %169 = vmatpush1.msra.mxu0 %v160
    %170 = vmatprep.subr.mxu0 0.0
    %171 = vmatpush1.msra.mxu0 %v159
    %172 = vmatprep.subr.mxu0 0.0
    %173 = vmatpush1.msra.mxu0 %v158
    %174 = vmatprep.subr.mxu0 0.0
    %175 = vmatpush1.msra.mxu0 %v157
    %176 = vmatprep.subr.mxu0 0.0
    %177 = vmatpush1.msra.mxu0 %v156
    %178 = vmatprep.subr.mxu0 0.0
    %179 = vmatpush1.msra.mxu0 %v155
    %180 = vmatprep.subr.mxu0 0.0
    %181 = vmatpush1.msra.mxu0 %v154
    %182 = vmatprep.subr.mxu0 0.0
    %183 = vmatpush1.msra.mxu0 %v153
    %184 = vmatprep.subr.mxu0 0.0
    %185 = vmatpush1.msra.mxu0 %v152
    %186 = vmatprep.subr.mxu0 0.0
    %187 = vmatpush1.msra.mxu0 %v151
    %188 = vmatprep.subr.mxu0 0.0
    %189 = vmatpush1.msra.mxu0 %v150
    %190 = vmatprep.subr.mxu0 0.0
    %191 = vmatpush1.msra.mxu0 %v149
    %192 = vmatprep.subr.mxu0 0.0
    %193 = vmatpush1.msra.mxu0 %v148
    %194 = vmatprep.subr.mxu0 0.0
    %195 = vmatpush1.msra.mxu0 %v147
    %196 = vmatprep.subr.mxu0 0.0
    %197 = vmatpush1.msra.mxu0 %v146
    %198 = vmatprep.subr.mxu0 0.0
    %199 = vmatpush1.msra.mxu0 %v145
    %200 = vmatprep.subr.mxu0 0.0
    %201 = vmatpush2.msra.mxu0 0.0
    %202 = vmatprep.subr.mxu0 0.0
    %203 = vmatpush2.msra.mxu0 0.0
    %204 = vmatprep.subr.mxu0 0.0
    %205 = vmatpush2.msra.mxu0 0.0
    %206 = vmatprep.subr.mxu0 0.0
    %207 = vmatpush2.msra.mxu0 0.0
    %208 = vmatprep.subr.mxu0 0.0
    %209 = vmatpush2.msra.mxu0 0.0
    %210 = vmatprep.subr.mxu0 0.0
    %211 = vmatpush2.msra.mxu0 0.0
    %212 = vmatprep.subr.mxu0 0.0
    %213 = vmatpush2.msra.mxu0 0.0
    %214 = vmatprep.subr.mxu0 0.0
    %215 = vmatpush2.msra.mxu0 0.0
    %216 = vmatprep.subr.mxu0 0.0
    %217 = vmatpush2.msra.mxu0 0.0
    %218 = vmatprep.subr.mxu0 0.0
    %219 = vmatpush2.msra.mxu0 0.0
    %220 = vmatprep.subr.mxu0 0.0
    %221 = vmatpush2.msra.mxu0 0.0
    %222 = vmatprep.subr.mxu0 0.0
    %223 = vmatpush2.msra.mxu0 0.0
    %224 = vmatprep.subr.mxu0 0.0
    %225 = vmatpush2.msra.mxu0 0.0
    %226 = vmatprep.subr.mxu0 0.0
    %227 = vmatpush2.msra.mxu0 0.0
    %228 = vmatprep.subr.mxu0 0.0
    %229 = vmatpush2.msra.mxu0 0.0
    %230 = vmatprep.subr.mxu0 0.0
    %231 = vmatpush2.msra.mxu0 0.0
    %232 = vmatprep.mubr.f32.mxu0 0.0
    %233 = vmatmul.mubr.f32.gmra.mxu0 %v144
    %v234 = vpop.f32.mrf.mxu0
    %v235 = vadd.f32 %v166, %v234
    %v236 = vpop.f32.mrf.mxu0
    %237 = vdwg.mxu0
    %238 = vst [vmem:[#allocation8] sm:$0xff] %v235
    // Predicated region
    $region34: #{mlp_forward.1} parent=1 // pred_check
      _
    $region35: #{mlp_forward.1} parent=1 // pred_check_branch
      %240 = sbr.rel (0) target = $region37
    $region36: #{mlp_forward.1} parent=1 // pred_region
      %s242 = ssub.s32 128, 128
      %243 = vsyncadd [#allocation4], %s242
      %s245 = sshll.u32 [#allocation8], 4
      %s246 = int_to_ptr.vmem [resolvable:$true] %s245
      %248 = dma.vmem_to_hbm [thread:$0]  %s246, 128, %s5, [#allocation4]
    $region37: #{mlp_forward.1} parent=1 // pred_fallthru
      _
    // Predicated region
    $region38: #{mlp_forward.1} parent=1 // pred_check
      _
    $region39: #{mlp_forward.1} parent=1 // pred_check_branch
      %250 = sbr.rel (0) target = $region41
    $region40: #{mlp_forward.1} parent=1 // pred_region
      %251 = dma.done [#allocation4], 128
    $region41: #{mlp_forward.1} parent=1 // pred_fallthru
      _
    %252 = vsyncpa [#allocation3], 1
    %253 = vsyncpa [#allocation6], 1
    %254 = vsyncpa [#allocation4], 1

</llo_original>
